<compile_context>
chip_gen: v6e
topology: v6e:2x2x1
jax: 0.10.0
libtpu: 0.0.40
codegen_flags: <defaults>
</compile_context>

<pallas_src>
import functools

import jax
import jax.numpy as jnp
import numpy as np
from jax.experimental import pallas as pl
from jax.experimental.pallas import tpu as pltpu

_NEG = -1e30  # finite "-inf" to avoid inf-inf NaNs


def _round_up(x, m):
    return ((x + m - 1) // m) * m


def _lm_head_ce_kernel(h_ref, w_ref, lab_ref, logits_ref, acc_ref,
                       m_sc, s_sc, t_sc, *, tv, v_actual, v_padded):
    # h_ref:      (1, TL, H)    bf16 hidden tile          (resident across V loop)
    # w_ref:      (TV, H)       bf16 tied lm_head weight tile (streamed over V)
    # lab_ref:    (1, TL, 1)    int32 shifted labels (-100 = ignore)
    # logits_ref: (1, TL, TV)   shift_logits tile (bf16; edge blocks masked)
    # acc_ref:    (1, 1, 8, 128) [0,0]=sum(loss), [0,1]=count(valid)
    # m_sc/s_sc/t_sc: (TL, 1) f32 running max / exp-sum / target logit
    v_idx = pl.program_id(2)
    nv = pl.num_programs(2)

    @pl.when(v_idx == 0)
    def _init():
        m_sc[...] = jnp.full_like(m_sc, _NEG)
        s_sc[...] = jnp.zeros_like(s_sc)
        t_sc[...] = jnp.zeros_like(t_sc)

    h = h_ref[0]            # (TL, H) bf16
    w = w_ref[...]          # (TV, H) bf16

    # lm_head tile: bf16 x bf16 -> f32 accumulation on the MXU
    logits = jax.lax.dot_general(h, w, (((1,), (1,)), ((), ())),
                                 preferred_element_type=jnp.float32)  # (TL, TV)

    # global vocab column index for this tile
    col = v_idx * tv + jax.lax.broadcasted_iota(jnp.int32, logits.shape, 1)
    if v_padded != v_actual:          # static: mask padded vocab columns
        logits = jnp.where(col < v_actual, logits, _NEG)

    logits_ref[0] = logits.astype(logits_ref.dtype)

    # online (flash-style) log-sum-exp across V tiles
    m_prev = m_sc[...]
    m_new = jnp.maximum(m_prev, jnp.max(logits, axis=-1, keepdims=True))
    alpha = jnp.exp(m_prev - m_new)
    s_sc[...] = alpha * s_sc[...] + jnp.sum(jnp.exp(logits - m_new),
                                            axis=-1, keepdims=True)
    m_sc[...] = m_new

    # target-logit gather: each label hits exactly one V tile (raw logit, no rescale)
    labels = lab_ref[0]                                   # (TL, 1)
    onehot = col == labels                                # (TL, TV); -100 never matches
    t_sc[...] += jnp.sum(jnp.where(onehot, logits, 0.0), axis=-1, keepdims=True)

    @pl.when(v_idx == nv - 1)
    def _finalize():
        lse = m_sc[...] + jnp.log(s_sc[...])              # (TL, 1)
        valid = labels != -100
        loss_pos = jnp.where(valid, lse - t_sc[...], 0.0)
        lsum = jnp.sum(loss_pos)
        cnt = jnp.sum(valid.astype(jnp.float32))
        sub = jax.lax.broadcasted_iota(jnp.int32, acc_ref.shape, 2)
        lane = jax.lax.broadcasted_iota(jnp.int32, acc_ref.shape, 3)
        acc_ref[...] = jnp.where(
            (sub == 0) & (lane == 0), lsum,
            jnp.where((sub == 0) & (lane == 1), cnt, 0.0)).astype(jnp.float32)


def fused_lm_head_ce(hidden, lm_weight, labels, *, tl=512, tv=1024,
                     logits_dtype=jnp.bfloat16, vmem_limit_bytes=None):
    """hidden: (B, L, H) f32, lm_weight: (V, H) f32, labels: (B, L) int32.
    Returns (mean CE loss over valid tokens, shift_logits (B, L-1, V))."""
    B, L, H = hidden.shape
    V = lm_weight.shape[0]
    Ls = L - 1                          # shifted sequence length

    tl = max(16, min(tl, _round_up(Ls, 16)))      # bf16 sublane-friendly L tile
    tv = max(128, min(tv, _round_up(V, 128)))     # lane-dense V tile

    itemsize = np.dtype(logits_dtype).itemsize

    def vmem_est(tl_, tv_):
        # double-buffered hidden + weight + logits + labels, scratch, loss block
        return (2 * tl_ * H * 2 + 2 * tv_ * H * 2 + 2 * tl_ * tv_ * itemsize
                + 2 * tl_ * 4 + 3 * tl_ * 4 + 2 * 8 * 128 * 4)

    budget = 48 * 1024 * 1024           # headroom for v7x's 64 MiB physical VMEM
    while vmem_est(tl, tv) > budget and tv > 512:
        tv //= 2
    while vmem_est(tl, tv) > budget and tl > 64:
        tl //= 2

    Lp = _round_up(Ls, tl)
    Vp = _round_up(V, tv)
    nl = Lp // tl
    nv = Vp // tv

    # fold the shift into the wrapper: positions 0..L-2 predict labels[1:]
    hidden_s = hidden[:, :Ls, :]
    shift_labels = labels[:, 1:].astype(jnp.int32)
    if Lp != Ls:
        hidden_s = jnp.pad(hidden_s, ((0, 0), (0, Lp - Ls), (0, 0)))
        shift_labels = jnp.pad(shift_labels, ((0, 0), (0, Lp - Ls)),
                               constant_values=-100)
    shift_labels = shift_labels.reshape(B, Lp, 1)
    if Vp != V:
        lm_weight = jnp.pad(lm_weight, ((0, Vp - V), (0, 0)))

    # bf16 inputs: half the HBM traffic, native MXU input type; f32 accumulation.
    hidden_bf16 = hidden_s.astype(jnp.bfloat16)
    weight_bf16 = lm_weight.astype(jnp.bfloat16)

    if vmem_limit_bytes is None:
        vmem_limit_bytes = int(min(max(2 * vmem_est(tl, tv), 32 * 1024 * 1024),
                                   56 * 1024 * 1024))

    kernel = functools.partial(_lm_head_ce_kernel, tv=tv, v_actual=V, v_padded=Vp)

    shift_logits, acc = pl.pallas_call(
        kernel,
        out_shape=(
            # final shape directly -> no post-kernel slice copy; edge blocks masked
            jax.ShapeDtypeStruct((B, Ls, V), logits_dtype),
            jax.ShapeDtypeStruct((B, nl, 8, 128), jnp.float32),
        ),
        grid_spec=pltpu.PrefetchScalarGridSpec(
            num_scalar_prefetch=0,
            grid=(B, nl, nv),                               # V innermost (reduction)
            in_specs=[
                pl.BlockSpec((1, tl, H), lambda b, l, v: (b, l, 0)),
                pl.BlockSpec((tv, H), lambda b, l, v: (v, 0)),   # constant in b, l
                pl.BlockSpec((1, tl, 1), lambda b, l, v: (b, l, 0)),
            ],
            out_specs=[
                pl.BlockSpec((1, tl, tv), lambda b, l, v: (b, l, v)),
                pl.BlockSpec((1, 1, 8, 128), lambda b, l, v: (b, l, 0, 0)),
            ],
            scratch_shapes=[
                pltpu.VMEM((tl, 1), jnp.float32),   # running max
                pltpu.VMEM((tl, 1), jnp.float32),   # running exp-sum
                pltpu.VMEM((tl, 1), jnp.float32),   # target logit
            ],
        ),
        compiler_params=pltpu.CompilerParams(
            dimension_semantics=("parallel", "parallel", "arbitrary"),
            vmem_limit_bytes=vmem_limit_bytes,
        ),
    )(hidden_bf16, weight_bf16, shift_labels)

    # CrossEntropyLoss(ignore_index=-100), reduction='mean' over valid tokens
    loss = jnp.sum(acc[..., 0, 0]) / jnp.maximum(jnp.sum(acc[..., 0, 1]), 1.0)
    return loss, shift_logits


def decoder_forward(hidden, lm_weight, labels, **kw):
    """Matches Decoder.forward(source_ids, labels) -> (loss, shift_logits)."""
    return fused_lm_head_ce(hidden, lm_weight, labels, **kw)


def reference_forward(hidden, lm_weight, labels):
    # Same bf16-input / f32-accumulate contract as the kernel.
    h = hidden.astype(jnp.bfloat16)
    w = lm_weight.astype(jnp.bfloat16)
    logits = jnp.einsum("blh,vh->blv", h, w, preferred_element_type=jnp.float32)
    shift_logits = logits[:, :-1, :]
    shift_labels = labels[:, 1:]
    lse = jax.nn.logsumexp(shift_logits, axis=-1)
    tgt = jnp.take_along_axis(
        shift_logits, jnp.clip(shift_labels, 0)[..., None], axis=-1)[..., 0]
    valid = shift_labels != -100
    loss = jnp.sum(jnp.where(valid, lse - tgt, 0.0)) / jnp.maximum(
        jnp.sum(valid.astype(jnp.float32)), 1.0)
    return loss, shift_logits


if __name__ == "__main__":
    B, L, H, V = 2, 32, 32, 256       # small config.hidden_size / vocab_size
    TL, TV = 16, 128                  # exercise L- and V-tiling (grid = 2 x 2 x 2)

    key = jax.random.PRNGKey(0)
    k_w, k_ids = jax.random.split(key, 2)

    # tied embedding / lm_head weight, deterministic init
    lm_weight = jax.random.normal(k_w, (V, H), dtype=jnp.float32) * 0.02
    source_ids = jax.random.randint(k_ids, (B, L), 0, V, dtype=jnp.int32)

    # labels = source_ids with a couple of ignored (-100) positions
    labels = source_ids.at[:, 0].set(-100)
    labels = labels.at[1, 5].set(-100)

    # external transformer decoder emulated as embedding lookup (see TODO above)
    hidden = lm_weight[source_ids]    # (B, L, H) f32

    loss, shift_logits = decoder_forward(hidden, lm_weight, labels, tl=TL, tv=TV)
    jax.block_until_ready((loss, shift_logits))

    ref_loss, ref_shift = reference_forward(hidden, lm_weight, labels)

    np.testing.assert_allclose(np.asarray(loss), np.asarray(ref_loss),
                               rtol=1e-4, atol=1e-4)
    got = np.asarray(shift_logits.astype(jnp.float32))
    want = np.asarray(ref_shift.astype(jnp.bfloat16).astype(jnp.float32))
    np.testing.assert_allclose(got, want, rtol=2e-2, atol=1e-4)

    print("KERNEL_OK")
</pallas_src>

<mosaic_0001>
module attributes {stable_mosaic.version = 11 : i64} {
  func.func @_lm_head_ce_kernel(%arg0: i32, %arg1: i32, %arg2: i32, %arg3: memref<1x16x32xbf16, #tpu.memory_space<vmem>>, %arg4: memref<128x32xbf16, #tpu.memory_space<vmem>>, %arg5: memref<1x16x1xi32, #tpu.memory_space<vmem>>, %arg6: memref<1x16x128xbf16, #tpu.memory_space<vmem>>, %arg7: memref<1x1x8x128xf32, #tpu.memory_space<vmem>>, %arg8: memref<16x1xf32, #tpu.memory_space<vmem>>, %arg9: memref<16x1xf32, #tpu.memory_space<vmem>>, %arg10: memref<16x1xf32, #tpu.memory_space<vmem>>) attributes {dimension_semantics = [#tpu.dimension_semantics<parallel>, #tpu.dimension_semantics<parallel>, #tpu.dimension_semantics<arbitrary>], iteration_bounds = array<i64: 2, 2, 2>, scalar_prefetch = 0 : i64, scratch_operands = 3 : i64, tpu.core_type = #tpu.core_type<tc>, window_params = [{transform_indices = @transform_0, window_bounds = array<i64: 1, 16, 32>}, {transform_indices = @transform_1, window_bounds = array<i64: 128, 32>}, {transform_indices = @transform_2, window_bounds = array<i64: 1, 16, 1>}, {transform_indices = @transform_3, window_bounds = array<i64: 1, 16, 128>}, {transform_indices = @transform_4, window_bounds = array<i64: 1, 1, 8, 128>}]} {
    %c0_i32 = arith.constant 0 : i32
    %0 = arith.cmpi eq, %arg2, %c0_i32 : i32
    %1 = arith.extui %0 : i1 to i32
    %c0_i32_0 = arith.constant 0 : i32
    %2 = arith.cmpi ne, %1, %c0_i32_0 : i32
    scf.if %2 {
      %cst_28 = arith.constant -1.000000e+30 : f32
      %45 = vector.broadcast %cst_28 : f32 to vector<16x1xf32>
      %c0_29 = arith.constant 0 : index
      %c0_30 = arith.constant 0 : index
      %46 = vector.load %arg8[%c0_29, %c0_30] : memref<16x1xf32, #tpu.memory_space<vmem>>, vector<16x1xf32>
      tpu.vector_store %arg8[%c0_29, %c0_30], %45 {strides = array<i32>} : memref<16x1xf32, #tpu.memory_space<vmem>>, vector<16x1xf32>,
      %cst_31 = arith.constant 0.000000e+00 : f32
      %47 = vector.broadcast %cst_31 : f32 to vector<16x1xf32>
      %c0_32 = arith.constant 0 : index
      %c0_33 = arith.constant 0 : index
      %48 = vector.load %arg9[%c0_32, %c0_33] : memref<16x1xf32, #tpu.memory_space<vmem>>, vector<16x1xf32>
      tpu.vector_store %arg9[%c0_32, %c0_33], %47 {strides = array<i32>} : memref<16x1xf32, #tpu.memory_space<vmem>>, vector<16x1xf32>,
      %cst_34 = arith.constant 0.000000e+00 : f32
      %49 = vector.broadcast %cst_34 : f32 to vector<16x1xf32>
      %c0_35 = arith.constant 0 : index
      %c0_36 = arith.constant 0 : index
      %50 = vector.load %arg10[%c0_35, %c0_36] : memref<16x1xf32, #tpu.memory_space<vmem>>, vector<16x1xf32>
      tpu.vector_store %arg10[%c0_35, %c0_36], %49 {strides = array<i32>} : memref<16x1xf32, #tpu.memory_space<vmem>>, vector<16x1xf32>,
    } else {
    }
    %c0 = arith.constant 0 : index
    %c0_1 = arith.constant 0 : index
    %c0_2 = arith.constant 0 : index
    %3 = vector.load %arg3[%c0, %c0_1, %c0_2] : memref<1x16x32xbf16, #tpu.memory_space<vmem>>, vector<1x16x32xbf16>
    %4 = vector.shape_cast %3 : vector<1x16x32xbf16> to vector<16x32xbf16>
    %c0_3 = arith.constant 0 : index
    %c0_4 = arith.constant 0 : index
    %5 = vector.load %arg4[%c0_3, %c0_4] : memref<128x32xbf16, #tpu.memory_space<vmem>>, vector<128x32xbf16>
    %cst = arith.constant dense<0.000000e+00> : vector<16x128xf32>
    %6 = tpu.matmul %4, %5, %cst {dimension_numbers = #tpu.dot_dimension_numbers<[1], [1], [0], [0], [0, 0, 1, 0], [], []>} : vector<16x32xbf16>, vector<128x32xbf16>, vector<16x128xf32> -> vector<16x128xf32>
    %c128_i32 = arith.constant 128 : i32
    %7 = arith.muli %arg2, %c128_i32 : i32
    %8 = tpu.iota {dimensions = array<i32: 1>} : vector<16x128xi32>
    %9 = vector.broadcast %7 : i32 to vector<16x128xi32>
    %10 = arith.addi %9, %8 : vector<16x128xi32>
    %11 = arith.truncf %6 : vector<16x128xf32> to vector<16x128xbf16>
    %c0_5 = arith.constant 0 : index
    %c0_6 = arith.constant 0 : index
    %c0_7 = arith.constant 0 : index
    %12 = vector.load %arg6[%c0_5, %c0_6, %c0_7] : memref<1x16x128xbf16, #tpu.memory_space<vmem>>, vector<1x16x128xbf16>
    %13 = vector.shape_cast %12 : vector<1x16x128xbf16> to vector<16x128xbf16>
    %14 = vector.shape_cast %11 : vector<16x128xbf16> to vector<1x16x128xbf16>
    tpu.vector_store %arg6[%c0_5, %c0_6, %c0_7], %14 {strides = array<i32>} : memref<1x16x128xbf16, #tpu.memory_space<vmem>>, vector<1x16x128xbf16>,
    %c0_8 = arith.constant 0 : index
    %c0_9 = arith.constant 0 : index
    %15 = vector.load %arg8[%c0_8, %c0_9] : memref<16x1xf32, #tpu.memory_space<vmem>>, vector<16x1xf32>
    %cst_10 = arith.constant dense<0xFF800000> : vector<16xf32>
    %16 = vector.multi_reduction <maximumf>, %6, %cst_10 [1] : vector<16x128xf32> to vector<16xf32>
    %17 = vector.shape_cast %16 : vector<16xf32> to vector<16x1xf32>
    %18 = arith.maximumf %15, %17 : vector<16x1xf32>
    %19 = arith.subf %15, %18 : vector<16x1xf32>
    %20 = math.exp %19 : vector<16x1xf32>
    %c0_11 = arith.constant 0 : index
    %c0_12 = arith.constant 0 : index
    %21 = vector.load %arg9[%c0_11, %c0_12] : memref<16x1xf32, #tpu.memory_space<vmem>>, vector<16x1xf32>
    %22 = arith.mulf %20, %21 : vector<16x1xf32>
    %23 = vector.broadcast %18 : vector<16x1xf32> to vector<16x128xf32>
    %24 = arith.subf %6, %23 : vector<16x128xf32>
    %25 = math.exp %24 : vector<16x128xf32>
    %cst_13 = arith.constant dense<0.000000e+00> : vector<16xf32>
    %26 = vector.multi_reduction <add>, %25, %cst_13 [1] : vector<16x128xf32> to vector<16xf32>
    %27 = vector.shape_cast %26 : vector<16xf32> to vector<16x1xf32>
    %28 = arith.addf %22, %27 : vector<16x1xf32>
    %c0_14 = arith.constant 0 : index
    %c0_15 = arith.constant 0 : index
    %29 = vector.load %arg9[%c0_14, %c0_15] : memref<16x1xf32, #tpu.memory_space<vmem>>, vector<16x1xf32>
    tpu.vector_store %arg9[%c0_14, %c0_15], %28 {strides = array<i32>} : memref<16x1xf32, #tpu.memory_space<vmem>>, vector<16x1xf32>,
    %c0_16 = arith.constant 0 : index
    %c0_17 = arith.constant 0 : index
    %30 = vector.load %arg8[%c0_16, %c0_17] : memref<16x1xf32, #tpu.memory_space<vmem>>, vector<16x1xf32>
    tpu.vector_store %arg8[%c0_16, %c0_17], %18 {strides = array<i32>} : memref<16x1xf32, #tpu.memory_space<vmem>>, vector<16x1xf32>,
    %c0_18 = arith.constant 0 : index
    %c0_19 = arith.constant 0 : index
    %c0_20 = arith.constant 0 : index
    %31 = vector.load %arg5[%c0_18, %c0_19, %c0_20] : memref<1x16x1xi32, #tpu.memory_space<vmem>>, vector<1x16x1xi32>
    %32 = vector.shape_cast %31 : vector<1x16x1xi32> to vector<16x1xi32>
    %33 = vector.broadcast %32 : vector<16x1xi32> to vector<16x128xi32>
    %34 = arith.cmpi eq, %10, %33 : vector<16x128xi32>
    %c0_21 = arith.constant 0 : index
    %c0_22 = arith.constant 0 : index
    %35 = vector.load %arg10[%c0_21, %c0_22] : memref<16x1xf32, #tpu.memory_space<vmem>>, vector<16x1xf32>
    %cst_23 = arith.constant 0.000000e+00 : f32
    %36 = vector.broadcast %cst_23 : f32 to vector<16x128xf32>
    %37 = arith.select %34, %6, %36 : vector<16x128xi1>, vector<16x128xf32>
    %cst_24 = arith.constant dense<0.000000e+00> : vector<16xf32>
    %38 = vector.multi_reduction <add>, %37, %cst_24 [1] : vector<16x128xf32> to vector<16xf32>
    %39 = vector.shape_cast %38 : vector<16xf32> to vector<16x1xf32>
    %40 = arith.addf %35, %39 : vector<16x1xf32>
    %c0_25 = arith.constant 0 : index
    %c0_26 = arith.constant 0 : index
    %41 = vector.load %arg10[%c0_25, %c0_26] : memref<16x1xf32, #tpu.memory_space<vmem>>, vector<16x1xf32>
    tpu.vector_store %arg10[%c0_25, %c0_26], %40 {strides = array<i32>} : memref<16x1xf32, #tpu.memory_space<vmem>>, vector<16x1xf32>,
    %c1_i32 = arith.constant 1 : i32
    %42 = arith.cmpi eq, %arg2, %c1_i32 : i32
    %43 = arith.extui %42 : i1 to i32
    %c0_i32_27 = arith.constant 0 : i32
    %44 = arith.cmpi ne, %43, %c0_i32_27 : i32
    scf.if %44 {
      %c0_28 = arith.constant 0 : index
      %c0_29 = arith.constant 0 : index
      %45 = vector.load %arg8[%c0_28, %c0_29] : memref<16x1xf32, #tpu.memory_space<vmem>>, vector<16x1xf32>
      %c0_30 = arith.constant 0 : index
      %c0_31 = arith.constant 0 : index
      %46 = vector.load %arg9[%c0_30, %c0_31] : memref<16x1xf32, #tpu.memory_space<vmem>>, vector<16x1xf32>
      %47 = math.log %46 : vector<16x1xf32>
      %48 = arith.addf %45, %47 : vector<16x1xf32>
      %c-100_i32 = arith.constant -100 : i32
      %49 = vector.broadcast %c-100_i32 : i32 to vector<16x1xi32>
      %50 = arith.cmpi ne, %32, %49 : vector<16x1xi32>
      %c0_32 = arith.constant 0 : index
      %c0_33 = arith.constant 0 : index
      %51 = vector.load %arg10[%c0_32, %c0_33] : memref<16x1xf32, #tpu.memory_space<vmem>>, vector<16x1xf32>
      %52 = arith.subf %48, %51 : vector<16x1xf32>
      %cst_34 = arith.constant 0.000000e+00 : f32
      %53 = vector.broadcast %cst_34 : f32 to vector<16x1xf32>
      %54 = arith.select %50, %52, %53 : vector<16x1xi1>, vector<16x1xf32>
      %55 = vector.shape_cast %54 : vector<16x1xf32> to vector<1x16x1xf32>
      %cst_35 = arith.constant dense<0.000000e+00> : vector<1xf32>
      %56 = vector.multi_reduction <add>, %55, %cst_35 [1, 2] : vector<1x16x1xf32> to vector<1xf32>
      %57 = vector.shape_cast %56 : vector<1xf32> to vector<1x1x1xf32>
      %58 = vector.extract %57[0, 0, 0] : f32 from vector<1x1x1xf32>
      %59 = arith.extui %50 : vector<16x1xi1> to vector<16x1xi32>
      %60 = arith.sitofp %59 : vector<16x1xi32> to vector<16x1xf32>
      %61 = vector.shape_cast %60 : vector<16x1xf32> to vector<1x16x1xf32>
      %cst_36 = arith.constant dense<0.000000e+00> : vector<1xf32>
      %62 = vector.multi_reduction <add>, %61, %cst_36 [1, 2] : vector<1x16x1xf32> to vector<1xf32>
      %63 = vector.shape_cast %62 : vector<1xf32> to vector<1x1x1xf32>
      %64 = vector.extract %63[0, 0, 0] : f32 from vector<1x1x1xf32>
      %65 = tpu.iota {dimensions = array<i32: 2>} : vector<1x1x8x128xi32>
      %66 = tpu.iota {dimensions = array<i32: 3>} : vector<1x1x8x128xi32>
      %c0_i32_37 = arith.constant 0 : i32
      %67 = vector.broadcast %c0_i32_37 : i32 to vector<1x1x8x128xi32>
      %68 = arith.cmpi eq, %65, %67 : vector<1x1x8x128xi32>
      %c0_i32_38 = arith.constant 0 : i32
      %69 = vector.broadcast %c0_i32_38 : i32 to vector<1x1x8x128xi32>
      %70 = arith.cmpi eq, %66, %69 : vector<1x1x8x128xi32>
      %71 = arith.andi %68, %70 : vector<1x1x8x128xi1>
      %c0_i32_39 = arith.constant 0 : i32
      %72 = vector.broadcast %c0_i32_39 : i32 to vector<1x1x8x128xi32>
      %73 = arith.cmpi eq, %65, %72 : vector<1x1x8x128xi32>
      %c1_i32_40 = arith.constant 1 : i32
      %74 = vector.broadcast %c1_i32_40 : i32 to vector<1x1x8x128xi32>
      %75 = arith.cmpi eq, %66, %74 : vector<1x1x8x128xi32>
      %76 = arith.andi %73, %75 : vector<1x1x8x128xi1>
      %cst_41 = arith.constant 0.000000e+00 : f32
      %77 = vector.broadcast %64 : f32 to vector<1x1x8x128xf32>
      %78 = vector.broadcast %cst_41 : f32 to vector<1x1x8x128xf32>
      %79 = arith.select %76, %77, %78 : vector<1x1x8x128xi1>, vector<1x1x8x128xf32>
      %80 = vector.broadcast %58 : f32 to vector<1x1x8x128xf32>
      %81 = arith.select %71, %80, %79 : vector<1x1x8x128xi1>, vector<1x1x8x128xf32>
      %c0_42 = arith.constant 0 : index
      %c0_43 = arith.constant 0 : index
      %c0_44 = arith.constant 0 : index
      %c0_45 = arith.constant 0 : index
      %82 = vector.load %arg7[%c0_42, %c0_43, %c0_44, %c0_45] : memref<1x1x8x128xf32, #tpu.memory_space<vmem>>, vector<1x1x8x128xf32>
      tpu.vector_store %arg7[%c0_42, %c0_43, %c0_44, %c0_45], %81 {strides = array<i32>} : memref<1x1x8x128xf32, #tpu.memory_space<vmem>>, vector<1x1x8x128xf32>,
    } else {
    }
    return
  }
  func.func @transform_0(%arg0: i32, %arg1: i32, %arg2: i32) -> (i32, i32, i32) {
    %c0_i32 = arith.constant 0 : i32
    %c0_i32_0 = arith.constant 0 : i32
    return %arg0, %arg1, %c0_i32 : i32, i32, i32
  }
  func.func @transform_1(%arg0: i32, %arg1: i32, %arg2: i32) -> (i32, i32) {
    %c0_i32 = arith.constant 0 : i32
    %c0_i32_0 = arith.constant 0 : i32
    return %arg2, %c0_i32 : i32, i32
  }
  func.func @transform_2(%arg0: i32, %arg1: i32, %arg2: i32) -> (i32, i32, i32) {
    %c0_i32 = arith.constant 0 : i32
    %c0_i32_0 = arith.constant 0 : i32
    return %arg0, %arg1, %c0_i32 : i32, i32, i32
  }
  func.func @transform_3(%arg0: i32, %arg1: i32, %arg2: i32) -> (i32, i32, i32) {
    %c0_i32 = arith.constant 0 : i32
    return %arg0, %arg1, %arg2 : i32, i32, i32
  }
  func.func @transform_4(%arg0: i32, %arg1: i32, %arg2: i32) -> (i32, i32, i32, i32) {
    %c0_i32 = arith.constant 0 : i32
    %c0_i32_0 = arith.constant 0 : i32
    %c0_i32_1 = arith.constant 0 : i32
    return %arg0, %arg1, %c0_i32, %c0_i32_0 : i32, i32, i32, i32
  }
}

</mosaic_0001>

<llo_original>
// kernel: tpu_custom_call.1
$region0: #{tpu_custom_call.1}
  #allocation0 [shape = 'u32[]', space=smem, size = 0x4, offset = 0x4, fixed_abs, tag = 'smem constant byte address 0x4 - core index']
  #allocation1 [shape = 'u32[144,128]{1,0:T(1,128)}', space=vmem, size = 0x12000, scoped, tag = 'internal scratch']
  #allocation2 [shape = 'f32[16,1]{1,0:T(8,128)}', space=vmem, size = 0x2000, scoped, tag = 'scratch operand']
  #allocation3 [shape = 'f32[16,1]{1,0:T(8,128)}', space=vmem, size = 0x2000, scoped, tag = 'scratch operand']
  #allocation4 [shape = 'f32[16,1]{1,0:T(8,128)}', space=vmem, size = 0x2000, scoped, tag = 'scratch operand']
  %s0 = inlined_call_operand.vmem [shape: bf16[2,32,32], index: 0, kind: input, shape index: {}]
  %s1 = inlined_call_operand.vmem [shape: bf16[256,32], index: 1, kind: input, shape index: {}]
  %s2 = inlined_call_operand.vmem [shape: s32[2,32,1], index: 2, kind: input, shape index: {}]
  %s3 = inlined_call_operand.vmem [shape: bf16[2,31,256], index: 3, kind: output, shape index: {0}]
  %s4 = inlined_call_operand.hbm [shape: f32[2,2,8,128], index: 4, kind: output, shape index: {1}]
  %5 = xla_tuple %s3, %s4
  %s6 = sld [smem:[#allocation0]]
  $region98: #{tpu_custom_call.1} parent=0
    _
  %s8 = ssub.s32 1, %s6
  %s9 = scalar_select 0, %s8, %s6
  $region1: #{tpu_custom_call.1} parent=0
    #allocation5 [shape = 'u8[8192]{0}', space=vmem, size = 0x2000, scoped, tag = 'output window, operand 0']
    #allocation6 [shape = 'u8[8192]{0}', space=vmem, size = 0x2000, scoped, tag = 'output window, operand 1']
    #allocation7 [shape = 's32[2]{0}', space=sflag, size = 0x8, scoped, tag = 'scoped memory for tpu_custom_call.1']
    %10 = vsyncpa [#allocation7], 0
    %s11 = scalar_lea.sflag [#allocation7], 1
    %12 = vsyncpa %s11, 0
    loop: start=0, step=1, limit=10
    $region2: #{tpu_custom_call.1} parent=1 // loop_pre_header
      _
    $region3: #{tpu_custom_call.1} parent=1 // loop_header
      %s14 = sphi 0, %s18
      %p15 = scmp.ge.s32.totalorder %s14, 10
      %s21 = sphi 0, %s40
      %s22 = sphi 0, %s36
      %s23 = sphi 0, %s32
      %s24 = sphi 0, %s21
      %s25 = sphi 0, %s22
      %s26 = sphi 0, %s23
      %s27 = sphi 0, %s24
      %s28 = sphi 0, %s25
      %s29 = sphi 0, %s26
      %s45 = sphi 0, %s47
      %s48 = sphi 0, %s45
      %s49 = sphi 0, %s48
      %s65 = sphi 0, %s49
      %s71 = sphi 0, %s73
      %s74 = sphi 0, %s71
      %s75 = sphi 0, %s74
      %s91 = sphi 0, %s75
      %s99 = sphi 0, %s101
      %s102 = sphi 0, %s99
      %s103 = sphi 0, %s102
      %s119 = sphi 0, %s103
      %s129 = sphi 0, %s131
      %s132 = sphi 0, %s129
      %s133 = sphi 0, %s132
      %s149 = sphi 0, %s133
      %s157 = sphi 0, %s159
      %s160 = sphi 0, %s157
      %s161 = sphi 0, %s160
      %s177 = sphi 0, %s161
    $region4: #{tpu_custom_call.1} parent=1 // loop_header_branch
      %17 = sbr.rel (%p15) target = $region8
    $region5: #{tpu_custom_call.1} parent=1 // loop_body
      %s19 = ssub.s32 %s14, 1
      %s20 = ssub.s32 %s14, 2
      %s30 = sadd.s32 1, %s23
      %p31 = scmp.ge.s32.totalorder %s30, 2
      %s32 = scalar_select %p31, 0, %s30
      %s33 = sadd.s32 1, %s22
      %s34 = scalar_select %p31, %s33, %s22
      %p35 = scmp.ge.s32.totalorder %s34, 2
      %s36 = scalar_select %p35, 0, %s34
      %s37 = sadd.s32 1, %s21
      %s38 = scalar_select %p35, %s37, %s21
      %p39 = scmp.ge.s32.totalorder %s38, 2
      %s40 = scalar_select %p39, 0, %s38
      %s41 = ssub.s32 %s21, %s40
      %s42 = ssub.s32 %s22, %s36
      %s43 = sor.u32 %s41, %s42
      %p44 = scmp.eq.s32.totalorder %s43, 0
      %s46 = sadd.s32 %s45, 1
      %s47 = scalar_select %p44, %s45, %s46
      %p50 = pneg %p44
      %p51 = scmp.eq.s32.totalorder %s14, 7
      %p52 = por %p50, %p51
      %p53 = scmp.ne.s32.totalorder %s45, %s48
      %p54 = scmp.eq.s32.totalorder %s14, 0
      %p55 = por %p53, %p54
      %p56 = scmp.ne.s32.totalorder %s45, %s48
      %p57 = scmp.eq.s32.totalorder %s19, 7
      %p58 = por %p56, %p57
      %p59 = scmp.ne.s32.totalorder %s48, %s49
      %p60 = scmp.eq.s32.totalorder %s19, 0
      %p61 = por %p59, %p60
      %p62 = scmp.ne.s32.totalorder %s48, %s49
      %p63 = scmp.eq.s32.totalorder %s20, 7
      %p64 = por %p62, %p63
      %p66 = scmp.ne.s32.totalorder %s49, %s65
      %p67 = scmp.eq.s32.totalorder %s20, 0
      %p68 = por %p66, %p67
      %s69 = ssub.s32 %s23, %s32
      %p70 = scmp.eq.s32.totalorder %s69, 0
      %s72 = sadd.s32 %s71, 1
      %s73 = scalar_select %p70, %s71, %s72
      %p76 = pneg %p70
      %p77 = scmp.eq.s32.totalorder %s14, 7
      %p78 = por %p76, %p77
      %p79 = scmp.ne.s32.totalorder %s71, %s74
      %p80 = scmp.eq.s32.totalorder %s14, 0
      %p81 = por %p79, %p80
      %p82 = scmp.ne.s32.totalorder %s71, %s74
      %p83 = scmp.eq.s32.totalorder %s19, 7
      %p84 = por %p82, %p83
      %p85 = scmp.ne.s32.totalorder %s74, %s75
      %p86 = scmp.eq.s32.totalorder %s19, 0
      %p87 = por %p85, %p86
      %p88 = scmp.ne.s32.totalorder %s74, %s75
      %p89 = scmp.eq.s32.totalorder %s20, 7
      %p90 = por %p88, %p89
      %p92 = scmp.ne.s32.totalorder %s75, %s91
      %p93 = scmp.eq.s32.totalorder %s20, 0
      %p94 = por %p92, %p93
      %s95 = ssub.s32 %s21, %s40
      %s96 = ssub.s32 %s22, %s36
      %s97 = sor.u32 %s95, %s96
      %p98 = scmp.eq.s32.totalorder %s97, 0
      %s100 = sadd.s32 %s99, 1
      %s101 = scalar_select %p98, %s99, %s100
      %p104 = pneg %p98
      %p105 = scmp.eq.s32.totalorder %s14, 7
      %p106 = por %p104, %p105
      %p107 = scmp.ne.s32.totalorder %s99, %s102
      %p108 = scmp.eq.s32.totalorder %s14, 0
      %p109 = por %p107, %p108
      %p110 = scmp.ne.s32.totalorder %s99, %s102
      %p111 = scmp.eq.s32.totalorder %s19, 7
      %p112 = por %p110, %p111
      %p113 = scmp.ne.s32.totalorder %s102, %s103
      %p114 = scmp.eq.s32.totalorder %s19, 0
      %p115 = por %p113, %p114
      %p116 = scmp.ne.s32.totalorder %s102, %s103
      %p117 = scmp.eq.s32.totalorder %s20, 7
      %p118 = por %p116, %p117
      %p120 = scmp.ne.s32.totalorder %s103, %s119
      %p121 = scmp.eq.s32.totalorder %s20, 0
      %p122 = por %p120, %p121
      %s123 = ssub.s32 %s21, %s40
      %s124 = ssub.s32 %s22, %s36
      %s125 = sor.u32 %s123, %s124
      %s126 = ssub.s32 %s23, %s32
      %s127 = sor.u32 %s125, %s126
      %p128 = scmp.eq.s32.totalorder %s127, 0
      %s130 = sadd.s32 %s129, 1
      %s131 = scalar_select %p128, %s129, %s130
      %p134 = pneg %p128
      %p135 = scmp.eq.s32.totalorder %s14, 7
      %p136 = por %p134, %p135
      %p137 = scmp.ne.s32.totalorder %s129, %s132
      %p138 = scmp.eq.s32.totalorder %s14, 0
      %p139 = por %p137, %p138
      %p140 = scmp.ne.s32.totalorder %s129, %s132
      %p141 = scmp.eq.s32.totalorder %s19, 7
      %p142 = por %p140, %p141
      %p143 = scmp.ne.s32.totalorder %s132, %s133
      %p144 = scmp.eq.s32.totalorder %s19, 0
      %p145 = por %p143, %p144
      %p146 = scmp.ne.s32.totalorder %s132, %s133
      %p147 = scmp.eq.s32.totalorder %s20, 7
      %p148 = por %p146, %p147
      %p150 = scmp.ne.s32.totalorder %s133, %s149
      %p151 = scmp.eq.s32.totalorder %s20, 0
      %p152 = por %p150, %p151
      %s153 = ssub.s32 %s21, %s40
      %s154 = ssub.s32 %s22, %s36
      %s155 = sor.u32 %s153, %s154
      %p156 = scmp.eq.s32.totalorder %s155, 0
      %s158 = sadd.s32 %s157, 1
      %s159 = scalar_select %p156, %s157, %s158
      %p162 = pneg %p156
      %p163 = scmp.eq.s32.totalorder %s14, 7
      %p164 = por %p162, %p163
      %p165 = scmp.ne.s32.totalorder %s157, %s160
      %p166 = scmp.eq.s32.totalorder %s14, 0
      %p167 = por %p165, %p166
      %p168 = scmp.ne.s32.totalorder %s157, %s160
      %p169 = scmp.eq.s32.totalorder %s19, 7
      %p170 = por %p168, %p169
      %p171 = scmp.ne.s32.totalorder %s160, %s161
      %p172 = scmp.eq.s32.totalorder %s19, 0
      %p173 = por %p171, %p172
      %p174 = scmp.ne.s32.totalorder %s160, %s161
      %p175 = scmp.eq.s32.totalorder %s20, 7
      %p176 = por %p174, %p175
      %p178 = scmp.ne.s32.totalorder %s161, %s177
      %p179 = scmp.eq.s32.totalorder %s20, 0
      %p180 = por %p178, %p179
      %p181 = scmp.le.s32.totalorder 1, %s14
      %p182 = scmp.lt.s32.totalorder %s14, 9
      %p183 = pnand %p181, %p182
      %p184 = pneg %p183
      // Predicated region
      $region9: #{tpu_custom_call.1} parent=5 // pred_check
        _
      $region10: #{tpu_custom_call.1} parent=5 // pred_check_branch
        %186 = sbr.rel (%p183) target = $region12
      $region11: #{tpu_custom_call.1} parent=5 // pred_region
        %s187 = ssub.s32 %s14, 1
      $region12: #{tpu_custom_call.1} parent=5 // pred_fallthru
        _
      %p188 = scmp.lt.s32.totalorder %s14, 8
      // Predicated region
      $region13: #{tpu_custom_call.1} parent=5 // pred_check
        %p189 = pneg %p188
      $region14: #{tpu_custom_call.1} parent=5 // pred_check_branch
        %191 = sbr.rel (%p189) target = $region16
      $region15: #{tpu_custom_call.1} parent=5 // pred_region
        // Predicated region
        $region17: #{tpu_custom_call.1} parent=15 // pred_check
          %p192 = pneg %p55
        $region18: #{tpu_custom_call.1} parent=15 // pred_check_branch
          %194 = sbr.rel (%p192) target = $region20
        $region19: #{tpu_custom_call.1} parent=15 // pred_region
          %s195 = smul.u32 2, %s22
          %p196 = scmp.lt.s32.totalorder %s21, 1
          %s197 = scalar_select %p196, %s21, 1
          %p198 = scmp.lt.s32.totalorder %s195, 3
          %s199 = scalar_select %p198, %s195, 3
          %s200 = smul.addr %s197, 4
          %s201 = sadd.s32 %s199, %s200
          %s202 = smul.addr %s201, 4
          %s203 = scalar_lea.vmem %s0, %s202
          %s204 = smul.u32 2, %s22
        $region20: #{tpu_custom_call.1} parent=15 // pred_fallthru
          _
        // Predicated region
        $region21: #{tpu_custom_call.1} parent=15 // pred_check
          %p205 = pneg %p81
        $region22: #{tpu_custom_call.1} parent=15 // pred_check_branch
          %207 = sbr.rel (%p205) target = $region24
        $region23: #{tpu_custom_call.1} parent=15 // pred_region
          %s208 = smul.u32 16, %s23
          %p209 = scmp.lt.s32.totalorder %s208, 31
          %s210 = scalar_select %p209, %s208, 31
          %s211 = smul.addr %s210, 4
          %s212 = scalar_lea.vmem %s1, %s211
          %s213 = smul.u32 16, %s23
        $region24: #{tpu_custom_call.1} parent=15 // pred_fallthru
          _
        // Predicated region
        $region25: #{tpu_custom_call.1} parent=15 // pred_check
          %p214 = pneg %p109
        $region26: #{tpu_custom_call.1} parent=15 // pred_check_branch
          %216 = sbr.rel (%p214) target = $region28
        $region27: #{tpu_custom_call.1} parent=15 // pred_region
          %s217 = smul.u32 2, %s22
          %p218 = scmp.lt.s32.totalorder %s21, 1
          %s219 = scalar_select %p218, %s21, 1
          %p220 = scmp.lt.s32.totalorder %s217, 3
          %s221 = scalar_select %p220, %s217, 3
          %s222 = smul.addr %s219, 4
          %s223 = sadd.s32 %s221, %s222
          %s224 = smul.addr %s223, 8
          %s225 = scalar_lea.vmem %s2, %s224
          %s226 = smul.u32 2, %s22
        $region28: #{tpu_custom_call.1} parent=15 // pred_fallthru
          _
      $region16: #{tpu_custom_call.1} parent=5 // pred_fallthru
        _
      %p227 = scmp.le.s32.totalorder 1, %s14
      %p228 = scmp.lt.s32.totalorder %s14, 9
      %p229 = pnand %p227, %p228
      %p230 = pneg %p229
      // Predicated region
      $region29: #{tpu_custom_call.1} parent=5 // pred_check
        _
      $region30: #{tpu_custom_call.1} parent=5 // pred_check_branch
        %232 = sbr.rel (%p229) target = $region32
      $region31: #{tpu_custom_call.1} parent=5 // pred_region
        %s233 = ssub.s32 %s14, 1
        %s234 = smul.u32 2, %s25
        %p235 = scmp.lt.s32.totalorder %s24, 1
        %s236 = scalar_select %p235, %s24, 1
        %p237 = scmp.lt.s32.totalorder %s234, 3
        %s238 = scalar_select %p237, %s234, 3
        %s239 = smul.addr %s236, 4
        %s240 = sadd.s32 %s238, %s239
        %s241 = smul.addr %s240, 4
        %s242 = scalar_lea.vmem %s0, %s241
        %p243 = pneg %p61
        %p244 = pneg %p58
        %s245 = smul.u32 16, %s26
        %p246 = scmp.lt.s32.totalorder %s245, 31
        %s247 = scalar_select %p246, %s245, 31
        %s248 = smul.addr %s247, 4
        %s249 = scalar_lea.vmem %s1, %s248
        %p250 = pneg %p87
        %p251 = pneg %p84
        %s252 = smul.u32 2, %s25
        %p253 = scmp.lt.s32.totalorder %s24, 1
        %s254 = scalar_select %p253, %s24, 1
        %p255 = scmp.lt.s32.totalorder %s252, 3
        %s256 = scalar_select %p255, %s252, 3
        %s257 = smul.addr %s254, 4
        %s258 = sadd.s32 %s256, %s257
        %s259 = smul.addr %s258, 8
        %s260 = scalar_lea.vmem %s2, %s259
        %p261 = pneg %p115
        %p262 = pneg %p112
        %p263 = pneg %p145
        %p264 = pneg %p142
        %s265 = sand.u32 %s132, 1
        %s266 = sand.u32 %s132, 1
        %s267 = smul.addr %s266, 8
        %s268 = scalar_lea.vmem [#allocation5], %s267
        %p269 = pneg %p173
        %p270 = pneg %p170
        %s271 = sand.u32 %s160, 1
        %s272 = scalar_lea.sflag [#allocation7], %s271
        %s273 = sand.u32 %s160, 1
        %s274 = smul.addr %s273, 8
        %s275 = scalar_lea.vmem [#allocation6], %s274
        %s276 = smul.u32 2, %s25
        %p277 = scmp.lt.s32.totalorder %s24, 1
        %s278 = scalar_select %p277, %s24, 1
        %p279 = scmp.lt.s32.totalorder %s276, 3
        %s280 = scalar_select %p279, %s276, 3
        %s281 = smul.addr %s278, 4
        %s282 = sadd.s32 %s280, %s281
        %s283 = smul.addr %s282, 4
        %s284 = scalar_lea.vmem %s0, %s283
        %s285 = smul.u32 2, %s25
        %s286 = smul.u32 16, %s26
        %p287 = scmp.lt.s32.totalorder %s286, 31
        %s288 = scalar_select %p287, %s286, 31
        %s289 = smul.addr %s288, 4
        %s290 = scalar_lea.vmem %s1, %s289
        %s291 = smul.u32 16, %s26
        %s292 = smul.u32 2, %s25
        %p293 = scmp.lt.s32.totalorder %s24, 1
        %s294 = scalar_select %p293, %s24, 1
        %p295 = scmp.lt.s32.totalorder %s292, 3
        %s296 = scalar_select %p295, %s292, 3
        %s297 = smul.addr %s294, 4
        %s298 = sadd.s32 %s296, %s297
        %s299 = smul.addr %s298, 8
        %s300 = scalar_lea.vmem %s2, %s299
        %s301 = smul.u32 2, %s25
        %s302 = smul.u32 2, %s25
        %p304 = scmp.eq.s32.totalorder %s26, 0
        // Predicated region
        $region33: #{tpu_custom_call.1} parent=31 // pred_check
          %p305 = pneg %p304
        $region34: #{tpu_custom_call.1} parent=31 // pred_check_branch
          %307 = sbr.rel (%p305) target = $region36
        $region35: #{tpu_custom_call.1} parent=31 // pred_region
          %vm308 = vcmask 7168
          %309 = vst.msk [vmem:[#allocation2] sm:$0xff] %vm308, -1e+30
          %310 = vst.msk [vmem:[#allocation2 + $0x8] sm:$0xff] %vm308, -1e+30
          %311 = vst.msk [vmem:[#allocation3] sm:$0xff] %vm308, 0.0
          %312 = vst.msk [vmem:[#allocation3 + $0x8] sm:$0xff] %vm308, 0.0
          %313 = vst.msk [vmem:[#allocation4] sm:$0xff] %vm308, 0.0
          %314 = vst.msk [vmem:[#allocation4 + $0x8] sm:$0xff] %vm308, 0.0
        $region36: #{tpu_custom_call.1} parent=31 // pred_fallthru
          _
        %v315 = vld [vmem:[%s284] sm:$0xf]
        %v316 = vld [vmem:[%s284 + $0x4] sm:$0xf]
        %v317 = vld [vmem:[%s290] sm:$0xf]
        %v318 = vld [vmem:[%s290 + $0x4] sm:$0xf]
        %v319 = vld [vmem:[%s290 + $0x8] sm:$0xf]
        %v320 = vld [vmem:[%s290 + $0xc] sm:$0xf]
        %v321 = vld [vmem:[%s290 + $0x10] sm:$0xf]
        %v322 = vld [vmem:[%s290 + $0x14] sm:$0xf]
        %v323 = vld [vmem:[%s290 + $0x18] sm:$0xf]
        %v324 = vld [vmem:[%s290 + $0x1c] sm:$0xf]
        %v325 = vld [vmem:[%s290 + $0x20] sm:$0xf]
        %v326 = vld [vmem:[%s290 + $0x24] sm:$0xf]
        %v327 = vld [vmem:[%s290 + $0x28] sm:$0xf]
        %v328 = vld [vmem:[%s290 + $0x2c] sm:$0xf]
        %v329 = vld [vmem:[%s290 + $0x30] sm:$0xf]
        %v330 = vld [vmem:[%s290 + $0x34] sm:$0xf]
        %v331 = vld [vmem:[%s290 + $0x38] sm:$0xf]
        %v332 = vld [vmem:[%s290 + $0x3c] sm:$0xf]
        %v335 = vunpack.c.l.b16 %v315
        %v336 = vunpack.c.l.b16 %v316
        %v337 = vpack.c.b16 %v336, %v335
        %v354 = vunpack.c.l.b16 %v317
        %v355 = vunpack.c.l.b16 %v318
        %v356 = vunpack.c.l.b16 %v319
        %v357 = vunpack.c.l.b16 %v320
        %v358 = vunpack.c.l.b16 %v321
        %v359 = vunpack.c.l.b16 %v322
        %v360 = vunpack.c.l.b16 %v323
        %v361 = vunpack.c.l.b16 %v324
        %v362 = vunpack.c.l.b16 %v325
        %v363 = vunpack.c.l.b16 %v326
        %v364 = vunpack.c.l.b16 %v327
        %v365 = vunpack.c.l.b16 %v328
        %v366 = vunpack.c.l.b16 %v329
        %v367 = vunpack.c.l.b16 %v330
        %v368 = vunpack.c.l.b16 %v331
        %v369 = vunpack.c.l.b16 %v332
        %v370 = vpack.c.b16 %v355, %v354
        %v371 = vpack.c.b16 %v357, %v356
        %v372 = vpack.c.b16 %v359, %v358
        %v373 = vpack.c.b16 %v361, %v360
        %v374 = vpack.c.b16 %v363, %v362
        %v375 = vpack.c.b16 %v365, %v364
        %v376 = vpack.c.b16 %v367, %v366
        %v377 = vpack.c.b16 %v369, %v368
        %vm378 = vcmask 261120
        %v380 = vsel %vm378, %v337, 0
        %v383 = vsel %vm378, %v370, 0
        %v386 = vsel %vm378, %v371, 0
        %v389 = vsel %vm378, %v372, 0
        %v392 = vsel %vm378, %v373, 0
        %v395 = vsel %vm378, %v374, 0
        %v398 = vsel %vm378, %v375, 0
        %v401 = vsel %vm378, %v376, 0
        %v404 = vsel %vm378, %v377, 0
        %406 = vmatprep.subr.bf16.mxu0 0
        %407 = vmatpush1.bf16.xpose.msra.mxu0 %v404
        %408 = vmatprep.subr.bf16.mxu0 0
        %409 = vmatpush1.bf16.xpose.msra.mxu0 %v401
        %410 = vmatprep.subr.bf16.mxu0 0
        %411 = vmatpush1.bf16.xpose.msra.mxu0 %v398
        %412 = vmatprep.subr.bf16.mxu0 0
        %413 = vmatpush1.bf16.xpose.msra.mxu0 %v395
        %414 = vmatprep.subr.bf16.mxu0 0
        %415 = vmatpush1.bf16.xpose.msra.mxu0 %v392
        %416 = vmatprep.subr.bf16.mxu0 0
        %417 = vmatpush1.bf16.xpose.msra.mxu0 %v389
        %418 = vmatprep.subr.bf16.mxu0 0
        %419 = vmatpush1.bf16.xpose.msra.mxu0 %v386
        %420 = vmatprep.subr.bf16.mxu0 0
        %421 = vmatpush1.bf16.xpose.msra.mxu0 %v383
        %422 = vmatprep.subr.bf16.mxu0 0
        %423 = vmatpush2.bf16.xpose.msra.mxu0 0
        %424 = vmatprep.subr.bf16.mxu0 0
        %425 = vmatpush2.bf16.xpose.msra.mxu0 0
        %426 = vmatprep.subr.bf16.mxu0 0
        %427 = vmatpush2.bf16.xpose.msra.mxu0 0
        %428 = vmatprep.subr.bf16.mxu0 0
        %429 = vmatpush2.bf16.xpose.msra.mxu0 0
        %430 = vmatprep.subr.bf16.mxu0 0
        %431 = vmatpush2.bf16.xpose.msra.mxu0 0
        %432 = vmatprep.subr.bf16.mxu0 0
        %433 = vmatpush2.bf16.xpose.msra.mxu0 0
        %434 = vmatprep.subr.bf16.mxu0 0
        %435 = vmatpush2.bf16.xpose.msra.mxu0 0
        %436 = vmatprep.subr.bf16.mxu0 0
        %437 = vmatpush2.bf16.xpose.msra.mxu0 0
        %438 = vmatprep.mubr.bf16.mxu0 0
        %439 = vmatmul.mubr.bf16.gmra.mxu0 %v380
        %v440 = vpop.f32.mrf.mxu0
        %v441 = vadd.f32 0.0, %v440
        %v442 = vpop.f32.mrf.mxu0
        %v443 = vpop.f32.mrf.mxu0
        %v444 = vadd.f32 0.0, %v443
        %v445 = vpop.f32.mrf.mxu0
        %446 = vdwg.mxu0
        %s447 = smul.u32 %s26, 128
        %v448 = vlaneseq
        %v449 = vand.u32 %v448, 127
        %v450 = vstv %s447
        %v451 = vadd.s32 %v450, %v449
        %v452 = vpack.c.bf16 %v444, %v441
        %v454 = vunpack.c.l.b16 %v452
        %v455 = vunpack.c.h.b16 %v452
        %v456 = vpack.c.b16 %v454, %v454
        %v457 = vpack.c.b16 %v455, %v455
        %460 = vst [vmem:[%s268] sm:$0xf] %v456
        %461 = vst [vmem:[%s268 + $0x4] sm:$0xf] %v457
        %v462 = vld [vmem:[#allocation2] sm:$0xff]
        %v463 = vld [vmem:[#allocation2 + $0x8] sm:$0xff]
        %464 = vmax.xlane.f32.xlu0 %v441
        %v465 = vpop.xlane.xlu0 %464
        %466 = vmax.xlane.f32.xlu0 %v444
        %v467 = vpop.xlane.xlu0 %466
        %v468 = vmax.f32 %v462, %v465
        %v469 = vmax.f32 %v463, %v467
        %v470 = vsub.f32 %v462, %v468
        %v471 = vsub.f32 %v463, %v469
        %v472 = vmul.f32 %v470, 1.442695
        %v473 = vpow.pop %v472
        %v474 = vmul.f32 %v471, 1.442695
        %v475 = vpow.pop %v474
        %v476 = vld [vmem:[#allocation3] sm:$0xff]
        %v477 = vld [vmem:[#allocation3 + $0x8] sm:$0xff]
        %v478 = vmul.f32 %v473, %v476
        %v479 = vmul.f32 %v475, %v477
        %481 = vset.pattern.permute.xlu0 0
        %482 = vperm.xlu0 %481, %v468
        %v483 = vpop.permute.xlu0 %482
        %486 = vset.pattern.permute.xlu0 0
        %487 = vperm.xlu0 %486, %v469
        %v488 = vpop.permute.xlu0 %487
        %v490 = vsub.f32 %v441, %v483
        %v491 = vsub.f32 %v444, %v488
        %v492 = vmul.f32 %v490, 1.442695
        %v493 = vpow.pop %v492
        %v494 = vmul.f32 %v491, 1.442695
        %v495 = vpow.pop %v494
        %496 = vadd.xlane.f32.xlu0 %v493
        %v497 = vpop.xlane.xlu0 %496
        %498 = vadd.xlane.f32.xlu0 %v495
        %v499 = vpop.xlane.xlu0 %498
        %v500 = vadd.f32 %v478, %v497
        %v501 = vadd.f32 %v479, %v499
        %vm502 = vcmask 7168
        %503 = vst.msk [vmem:[#allocation3] sm:$0xff] %vm502, %v500
        %504 = vst.msk [vmem:[#allocation3 + $0x8] sm:$0xff] %vm502, %v501
        %505 = vst.msk [vmem:[#allocation2] sm:$0xff] %vm502, %v468
        %506 = vst.msk [vmem:[#allocation2 + $0x8] sm:$0xff] %vm502, %v469
        %v507 = vld [vmem:[%s300] sm:$0xff]
        %v508 = vld [vmem:[%s300 + $0x8] sm:$0xff]
        %509 = vset.pattern.permute.xlu0 0
        %510 = vperm.xlu0 %509, %v507
        %v511 = vpop.permute.xlu0 %510
        %512 = vset.pattern.permute.xlu0 0
        %513 = vperm.xlu0 %512, %v508
        %v514 = vpop.permute.xlu0 %513
        %vm515 = vcmp.eq.s32.totalorder %v451, %v511
        %vm516 = vcmp.eq.s32.totalorder %v451, %v514
        %v517 = vld [vmem:[#allocation4] sm:$0xff]
        %v518 = vld [vmem:[#allocation4 + $0x8] sm:$0xff]
        %v519 = vsel %vm515, %v441, 0.0
        %v520 = vsel %vm516, %v444, 0.0
        %521 = vadd.xlane.f32.xlu0 %v519
        %v522 = vpop.xlane.xlu0 %521
        %523 = vadd.xlane.f32.xlu0 %v520
        %v524 = vpop.xlane.xlu0 %523
        %v525 = vadd.f32 %v517, %v522
        %v526 = vadd.f32 %v518, %v524
        %527 = vst.msk [vmem:[#allocation4] sm:$0xff] %vm502, %v525
        %528 = vst.msk [vmem:[#allocation4 + $0x8] sm:$0xff] %vm502, %v526
        %p529 = scmp.eq.s32.totalorder %s26, 1
        // Predicated region
        $region37: #{tpu_custom_call.1} parent=31 // pred_check
          %p530 = pneg %p529
        $region38: #{tpu_custom_call.1} parent=31 // pred_check_branch
          %532 = sbr.rel (%p530) target = $region40
        $region39: #{tpu_custom_call.1} parent=31 // pred_region
          %v533 = vld [vmem:[#allocation2] sm:$0xff]
          %v534 = vld [vmem:[#allocation2 + $0x8] sm:$0xff]
          %v535 = vld [vmem:[#allocation3] sm:$0xff]
          %v536 = vld [vmem:[#allocation3 + $0x8] sm:$0xff]
          %v537 = vlog2.pop %v535
          %v538 = vmul.f32 %v537, 0.6931472
          %v539 = vlog2.pop %v536
          %v540 = vmul.f32 %v539, 0.6931472
          %v541 = vadd.f32 %v533, %v538
          %v542 = vadd.f32 %v534, %v540
          %vm543 = vcmp.ne.s32.totalorder %v507, 4294967196
          %vm544 = vcmp.ne.s32.totalorder %v508, 4294967196
          %v545 = vld [vmem:[#allocation4] sm:$0xff]
          %v546 = vld [vmem:[#allocation4 + $0x8] sm:$0xff]
          %v547 = vsub.f32 %v541, %v545
          %v548 = vsub.f32 %v542, %v546
          %v549 = vsel %vm543, %v547, 0.0
          %v550 = vsel %vm544, %v548, 0.0
          %v551 = vsel %vm502, %v549, 0.0
          %v552 = vsel %vm502, %v550, 0.0
          %v553 = vadd.f32 %v551, %v552
          %554 = vadd.xlane.f32.xlu0 %v553
          %v555 = vpop.xlane.xlu0 %554
          %v556 = vrot.slane %v555, 4
          %v557 = vadd.f32 %v555, %v556
          %v558 = vrot.slane %v557, 2
          %v559 = vadd.f32 %v557, %v558
          %v560 = vrot.slane %v559, 1
          %v561 = vadd.f32 %v559, %v560
          %s562 = vtos %v561
          %v563 = vsel %vm543, 1, 0
          %v564 = vsel %vm544, 1, 0
          %v565 = vcvt.s32.f32 %v563
          %v566 = vcvt.s32.f32 %v564
          %v567 = vsel %vm502, %v565, 0.0
          %v568 = vsel %vm502, %v566, 0.0
          %v569 = vadd.f32 %v567, %v568
          %570 = vadd.xlane.f32.xlu0 %v569
          %v571 = vpop.xlane.xlu0 %570
          %v572 = vrot.slane %v571, 4
          %v573 = vadd.f32 %v571, %v572
          %v574 = vrot.slane %v573, 2
          %v575 = vadd.f32 %v573, %v574
          %v576 = vrot.slane %v575, 1
          %v577 = vadd.f32 %v575, %v576
          %s578 = vtos %v577
          %v579 = vlaneseq
          %v580 = vshrl.u32 %v579, 7
          %vm581 = vcmp.eq.s32.totalorder %v580, 0
          %vm582 = vcmp.eq.s32.totalorder %v449, 0
          %vm583 = vmand %vm581, %vm582
          %vm584 = vcmp.eq.s32.totalorder %v449, 1
          %vm585 = vmand %vm581, %vm584
          %v586 = vstv %s578
          %v587 = vsel %vm585, %v586, 0.0
          %v588 = vstv %s562
          %v589 = vsel %vm583, %v588, %v587
          %590 = vst [vmem:[%s275] sm:$0xff] %v589
        $region40: #{tpu_custom_call.1} parent=31 // pred_fallthru
          _
        %s591 = sand.u32 %s132, 1
        %s592 = sand.u32 %s132, 1
        %s593 = smul.addr %s592, 8
        %s594 = scalar_lea.vmem [#allocation5], %s593
        %s595 = sand.u32 %s160, 1
        %s596 = scalar_lea.sflag [#allocation7], %s595
        %s597 = sand.u32 %s160, 1
        %s598 = smul.addr %s597, 8
        %s599 = scalar_lea.vmem [#allocation6], %s598
        // Predicated region
        $region41: #{tpu_custom_call.1} parent=31 // pred_check
          %p600 = pneg %p142
        $region42: #{tpu_custom_call.1} parent=31 // pred_check_branch
          %602 = sbr.rel (%p600) target = $region44
        $region43: #{tpu_custom_call.1} parent=31 // pred_region
          %s603 = smul.u32 2, %s25
          %s604 = smul.addr %s603, 2
          %s605 = sadd.s32 %s26, %s604
          %s606 = smul.addr %s24, 8
          %s607 = sadd.s32 %s605, %s606
          %s608 = smul.addr %s607, 4
          %s609 = scalar_lea.vmem %s3, %s608
          // Predicated region
          $region45: #{tpu_custom_call.1} parent=43 // pred_check
            _
          $region46: #{tpu_custom_call.1} parent=43 // pred_check_branch
            %611 = sbr.rel (0) target = $region48
          $region47: #{tpu_custom_call.1} parent=43 // pred_region
            // Predicated region
            $region49: #{tpu_custom_call.1} parent=47 // pred_check
              _
            $region50: #{tpu_custom_call.1} parent=47 // pred_check_branch
              %613 = sbr.rel target = $region52
            $region51: #{tpu_custom_call.1} parent=47 // pred_region
              // Predicated region
              $region64: #{tpu_custom_call.1} parent=51 // pred_check
                _
              $region65: #{tpu_custom_call.1} parent=51 // pred_check_branch
                %631 = sbr.rel (0) target = $region67
              $region66: #{tpu_custom_call.1} parent=51 // pred_region
                loop: start=0, step=1, limit=1
                $region68: #{tpu_custom_call.1} parent=66 // loop_pre_header
                  _
                $region69: #{tpu_custom_call.1} parent=66 // loop_header
                  %s633 = sphi 0, %s637
                  %p634 = scmp.ge.s32.totalorder %s633, 1
                  %s638 = sphi %s594, %s594
                  %s639 = sphi %s609, %s609
                $region70: #{tpu_custom_call.1} parent=66 // loop_header_branch
                  %636 = sbr.rel (%p634) target = $region74
                $region71: #{tpu_custom_call.1} parent=66 // loop_body
                  _
                $region72: #{tpu_custom_call.1} parent=66 // loop_footer
                  %s637 = sadd.s32 1, %s633
                $region73: #{tpu_custom_call.1} parent=66 // loop_footer_branch
                  %632 = sbr.rel target = $region69
                $region74: #{tpu_custom_call.1} parent=66 // loop_exit
                  _
                %s641 = ssub.s32 16, 1
                loop: start=0, step=1, limit=1
                $region75: #{tpu_custom_call.1} parent=66 // loop_pre_header
                  _
                $region76: #{tpu_custom_call.1} parent=66 // loop_header
                  %s643 = sphi 0, %s647
                  %p644 = scmp.ge.s32.totalorder %s643, 1
                  %s648 = sphi %s594, %s594
                  %s649 = sphi %s609, %s609
                $region77: #{tpu_custom_call.1} parent=66 // loop_header_branch
                  %646 = sbr.rel (%p644) target = $region81
                $region78: #{tpu_custom_call.1} parent=66 // loop_body
                  %v650 = vld [vmem:[%s648] sm:%s641]
                  %651 = vst [vmem:[%s649] sm:%s641] %v650
                  %v652 = vld [vmem:[%s648 + $0x4] sm:%s641]
                  %653 = vst [vmem:[%s649 + $0x8] sm:%s641] %v652
                $region79: #{tpu_custom_call.1} parent=66 // loop_footer
                  %s647 = sadd.s32 1, %s643
                $region80: #{tpu_custom_call.1} parent=66 // loop_footer_branch
                  %642 = sbr.rel target = $region76
                $region81: #{tpu_custom_call.1} parent=66 // loop_exit
                  _
              $region67: #{tpu_custom_call.1} parent=51 // pred_fallthru
                _
            $region52: #{tpu_custom_call.1} parent=47 // pred_fallthru
              _
            // Predicated region
            $region53: #{tpu_custom_call.1} parent=47 // pred_check
              _
            $region54: #{tpu_custom_call.1} parent=47 // pred_check_branch
              %615 = sbr.rel (0) target = $region56
            $region55: #{tpu_custom_call.1} parent=47 // pred_region
              %s617 = ssub.s32 16, 1
              loop: start=0, step=1, limit=1
              $region57: #{tpu_custom_call.1} parent=55 // loop_pre_header
                _
              $region58: #{tpu_custom_call.1} parent=55 // loop_header
                %s619 = sphi 0, %s623
                %p620 = scmp.ge.s32.totalorder %s619, 1
                %s624 = sphi %s594, %s594
                %s625 = sphi %s609, %s609
              $region59: #{tpu_custom_call.1} parent=55 // loop_header_branch
                %622 = sbr.rel (%p620) target = $region63
              $region60: #{tpu_custom_call.1} parent=55 // loop_body
                %v626 = vld [vmem:[%s624] sm:%s617]
                %627 = vst [vmem:[%s625] sm:%s617] %v626
                %v628 = vld [vmem:[%s624 + $0x4] sm:%s617]
                %629 = vst [vmem:[%s625 + $0x8] sm:%s617] %v628
              $region61: #{tpu_custom_call.1} parent=55 // loop_footer
                %s623 = sadd.s32 1, %s619
              $region62: #{tpu_custom_call.1} parent=55 // loop_footer_branch
                %618 = sbr.rel target = $region58
              $region63: #{tpu_custom_call.1} parent=55 // loop_exit
                _
            $region56: #{tpu_custom_call.1} parent=47 // pred_fallthru
              _
          $region48: #{tpu_custom_call.1} parent=43 // pred_fallthru
            _
          %654 = vnop
        $region44: #{tpu_custom_call.1} parent=31 // pred_fallthru
          _
        // Predicated region
        $region82: #{tpu_custom_call.1} parent=31 // pred_check
          %p655 = pneg %p170
        $region83: #{tpu_custom_call.1} parent=31 // pred_check_branch
          %657 = sbr.rel (%p655) target = $region85
        $region84: #{tpu_custom_call.1} parent=31 // pred_region
          %s659 = ssub.s32 128, 128
          %660 = vsyncadd %s596, %s659
          %s661 = smul.addr %s24, 2
          %s662 = sadd.s32 %s25, %s661
          %s663 = smul.addr %s662, 128
          %s664 = scalar_lea.hbm %s4, %s663
          %s666 = sshll.u32 %s599, 4
          %s667 = int_to_ptr.vmem [resolvable:$true] %s666
          %669 = dma.vmem_to_hbm [thread:$0]  %s667, 128, %s664, %s596
        $region85: #{tpu_custom_call.1} parent=31 // pred_fallthru
          _
      $region32: #{tpu_custom_call.1} parent=5 // pred_fallthru
        _
      %p670 = scmp.le.s32.totalorder 2, %s14
      // Predicated region
      $region86: #{tpu_custom_call.1} parent=5 // pred_check
        %p671 = pneg %p670
      $region87: #{tpu_custom_call.1} parent=5 // pred_check_branch
        %673 = sbr.rel (%p671) target = $region89
      $region88: #{tpu_custom_call.1} parent=5 // pred_region
        %s674 = ssub.s32 %s14, 2
        // Predicated region
        $region90: #{tpu_custom_call.1} parent=88 // pred_check
          %p675 = pneg %p148
        $region91: #{tpu_custom_call.1} parent=88 // pred_check_branch
          %677 = sbr.rel (%p675) target = $region93
        $region92: #{tpu_custom_call.1} parent=88 // pred_region
          %s678 = sand.u32 %s133, 1
          %s679 = sand.u32 %s133, 1
          %s680 = smul.addr %s679, 8
          %s681 = scalar_lea.vmem [#allocation5], %s680
        $region93: #{tpu_custom_call.1} parent=88 // pred_fallthru
          _
        // Predicated region
        $region94: #{tpu_custom_call.1} parent=88 // pred_check
          %p682 = pneg %p176
        $region95: #{tpu_custom_call.1} parent=88 // pred_check_branch
          %684 = sbr.rel (%p682) target = $region97
        $region96: #{tpu_custom_call.1} parent=88 // pred_region
          %s685 = sand.u32 %s161, 1
          %s686 = scalar_lea.sflag [#allocation7], %s685
          %s687 = sand.u32 %s161, 1
          %s688 = smul.addr %s687, 8
          %s689 = scalar_lea.vmem [#allocation6], %s688
          %690 = dma.done %s686, 128
        $region97: #{tpu_custom_call.1} parent=88 // pred_fallthru
          _
      $region89: #{tpu_custom_call.1} parent=5 // pred_fallthru
        _
    $region6: #{tpu_custom_call.1} parent=1 // loop_footer
      %s18 = sadd.s32 1, %s14
    $region7: #{tpu_custom_call.1} parent=1 // loop_footer_branch
      %13 = sbr.rel target = $region3
    $region8: #{tpu_custom_call.1} parent=1 // loop_exit
      _
    %691 = vsyncpa [#allocation7], 1
    %s692 = scalar_lea.sflag [#allocation7], 1
    %693 = vsyncpa %s692, 1

</llo_original>
